<compile_context>
chip_gen: v5e
topology: v5e:2x2
jax: 0.10.0
libtpu: 0.0.40
codegen_flags: <defaults>
</compile_context>

<pallas_src>
import functools
import math

import jax
import jax.numpy as jnp
from jax.experimental import pallas as pl
from jax.experimental.pallas import tpu as pltpu


def _round_up(x, m):
    return (x + m - 1) // m * m


def _device_kind():
    try:
        return jax.devices()[0].device_kind.lower()
    except Exception:
        return ""


def _vmem_capacity_bytes():
    """Best-effort physical per-core VMEM; conservative fallback."""
    try:
        v = int(pltpu.get_tpu_info().vmem_capacity_bytes)
        if 8 * 2**20 <= v <= 512 * 2**20:
            return v
    except Exception:
        pass
    kind = _device_kind()
    if "v7" in kind:
        return 64 * 2**20
    if "v5" in kind or "v6" in kind:
        return 128 * 2**20
    if "v2" in kind or "v3" in kind:
        return 16 * 2**20
    return 64 * 2**20


def _is_v7x():
    return "v7" in _device_kind()


def _focal_loss_kernel(pred_ref, tgt_ref, out_ref, acc_ref, *,
                       gamma, log_lo, log_hi, n_rows, tile_n, tiles_per_core):
    c = pl.program_id(0)
    i = pl.program_id(1)

    @pl.when(i == 0)
    def _():
        acc_ref[...] = jnp.zeros_like(acc_ref)

    x = pred_ref[...].astype(jnp.float32)             # (TN, C) f32 in-register
    t = tgt_ref[...]                                  # (TN, 1) int32

    # Gather the target-class *raw* logit via lane-index compare (in-kernel
    # one-hot); independent of the exp() below, so it overlaps the EUP work.
    cols = jax.lax.broadcasted_iota(jnp.int32, x.shape, 1)
    x_t = jnp.sum(jnp.where(cols == t, x, 0.0), axis=-1, keepdims=True)   # (TN,1)

    # Stable log-softmax of the target class; exp is the only full-tile
    # transcendental.  log p_t = x_t - m - log(sum exp(x - m)).
    m = jnp.max(x, axis=-1, keepdims=True)             # (TN, 1)
    s = jnp.sum(jnp.exp(x - m), axis=-1, keepdims=True)  # (TN, 1)
    log_pt = x_t - m - jnp.log(s)

    # clip(softmax, eps, 1-eps) applied in the log domain (equivalent).
    log_pt = jnp.clip(log_pt, log_lo, log_hi)
    p_t = jnp.exp(log_pt)                               # (TN, 1)

    one_minus = 1.0 - p_t
    if float(gamma).is_integer() and 0.0 <= gamma <= 16.0:
        w = jnp.ones_like(one_minus)                    # VPU multiplies, no pow
        for _ in range(int(gamma)):
            w = w * one_minus
    else:
        w = jnp.power(one_minus, gamma)

    # Ragged tail: rows with absolute index >= n_rows hold garbage -> mask to 0.
    row0 = (c * tiles_per_core + i) * tile_n
    rows = jax.lax.broadcasted_iota(jnp.int32, (x.shape[0], 1), 0) + row0
    loss_rows = jnp.where(rows < n_rows, -w * log_pt, 0.0)   # (TN, 1)

    acc_ref[...] += jnp.sum(loss_rows, keepdims=True)         # (1, 1)

    @pl.when(i == pl.num_programs(1) - 1)
    def _():
        out_ref[...] = acc_ref[...]


def focal_loss(predictions, targets, gamma=2.0, eps=1e-7, tile_n=None):
    """predictions: (N, C) float, targets: (N,) int class ids.  Returns scalar sum."""
    N, C = predictions.shape
    assert targets.shape == (N,)
    tgt2d = targets.astype(jnp.int32).reshape(N, 1)     # free view: no pad/copy

    # Generation-aware VMEM limits / tile budget.
    vmem_phys = _vmem_capacity_bytes()
    vmem_limit = max(12 * 2**20, (vmem_phys * 3) // 4)
    vmem_limit = min(vmem_limit, vmem_phys - 2 * 2**20)

    c_lanes = _round_up(C, 128)                          # lane-padded width in VMEM
    itemsize = predictions.dtype.itemsize
    # Per row of tile: double-buffered pred block (real dtype), double-buffered
    # lane-padded target column, plus headroom for in-kernel f32 temporaries
    # and (TN,1) column intermediates.
    per_row = (2 * c_lanes * itemsize) + (6 * c_lanes * 4) + (6 * 128 * 4)
    budget = vmem_limit // 2                             # slack vs. the hard limit

    if tile_n is None:
        tile_n = budget // per_row
    tile_n = int(tile_n)
    if N <= 8:
        tile_n = N                                       # one full block (== array dim)
    else:
        tile_n = max(8, min(tile_n, 32768, N) // 8 * 8)

    tiles = -(-N // tile_n)
    n_par = 2 if (_is_v7x() and tiles >= 2) else 1       # 2 TCs only on v7x
    tiles_per_core = -(-tiles // n_par)

    def in_index(c, i):
        # Clamp so padded (c, i) combos (when tiles is odd) stay in range; the
        # duplicated block contributes 0 because its absolute rows are >= N.
        return (jnp.minimum(c * tiles_per_core + i, tiles - 1), 0)

    kernel = functools.partial(
        _focal_loss_kernel,
        gamma=float(gamma),
        log_lo=math.log(eps),
        log_hi=math.log1p(-eps),
        n_rows=N,
        tile_n=tile_n,
        tiles_per_core=tiles_per_core)

    out = pl.pallas_call(
        kernel,
        out_shape=jax.ShapeDtypeStruct((n_par, 1, 1), jnp.float32),
        grid=(n_par, tiles_per_core),
        in_specs=[
            pl.BlockSpec((tile_n, C), in_index),
            pl.BlockSpec((tile_n, 1), in_index),
        ],
        out_specs=pl.BlockSpec((None, 1, 1), lambda c, i: (c, 0, 0)),
        scratch_shapes=[pltpu.VMEM((1, 1), jnp.float32)],
        compiler_params=pltpu.CompilerParams(
            dimension_semantics=("parallel", "arbitrary"),
            vmem_limit_bytes=int(vmem_limit)),
    )(predictions, tgt2d)
    return jnp.sum(out)


def _focal_loss_ref(predictions, targets, gamma=2.0, eps=1e-7):
    """Pure-JAX reference mirroring the PyTorch forward."""
    C = predictions.shape[-1]
    y = jax.nn.one_hot(targets, C, dtype=jnp.float32)
    p = jax.nn.softmax(predictions.astype(jnp.float32), axis=-1)
    p = jnp.clip(p, eps, 1.0 - eps)
    loss = -y * jnp.log(p) * (1.0 - p) ** gamma
    return jnp.sum(loss)


if __name__ == "__main__":
    key = jax.random.PRNGKey(0)
    k1, k2, k3, k4, k5, k6 = jax.random.split(key, 6)

    # Small case consistent with the module: (batch, num_classes).
    N, C = 8, 32
    predictions = jax.random.normal(k1, (N, C), dtype=jnp.float32)
    targets = jax.random.randint(k2, (N,), 0, C, dtype=jnp.int32)
    out = jax.block_until_ready(focal_loss(predictions, targets, gamma=2.0, eps=1e-7))
    ref = _focal_loss_ref(predictions, targets, gamma=2.0, eps=1e-7)
    assert jnp.allclose(out, ref, rtol=1e-5, atol=1e-5), (out, ref)

    # Multi-tile case: accumulation + in-kernel ragged-tail masking (no padding).
    N2, C2 = 300, 40
    pred2 = jax.random.normal(k3, (N2, C2), dtype=jnp.float32)
    tgt2 = jax.random.randint(k4, (N2,), 0, C2, dtype=jnp.int32)
    out2 = jax.block_until_ready(focal_loss(pred2, tgt2, gamma=2.0, eps=1e-7, tile_n=64))
    ref2 = _focal_loss_ref(pred2, tgt2, gamma=2.0, eps=1e-7)
    assert jnp.allclose(out2, ref2, rtol=1e-5, atol=1e-4), (out2, ref2)

    # Auto tile selection with a non-multiple-of-8 row count (ragged last block).
    N3, C3 = 203, 64
    pred3 = jax.random.normal(k5, (N3, C3), dtype=jnp.float32)
    tgt3 = jax.random.randint(k6, (N3,), 0, C3, dtype=jnp.int32)
    out3 = jax.block_until_ready(focal_loss(pred3, tgt3, gamma=2.0, eps=1e-7))
    ref3 = _focal_loss_ref(pred3, tgt3, gamma=2.0, eps=1e-7)
    assert jnp.allclose(out3, ref3, rtol=1e-5, atol=1e-4), (out3, ref3)

    print("KERNEL_OK")
</pallas_src>

<mosaic_0001>
module attributes {stable_mosaic.version = 11 : i64} {
  func.func @_focal_loss_kernel(%arg0: i32, %arg1: i32, %arg2: memref<8x32xf32, #tpu.memory_space<vmem>>, %arg3: memref<8x1xi32, #tpu.memory_space<vmem>>, %arg4: memref<1x1x1xf32, #tpu.memory_space<vmem>>, %arg5: memref<1x1xf32, #tpu.memory_space<vmem>>) attributes {dimension_semantics = [#tpu.dimension_semantics<parallel>, #tpu.dimension_semantics<arbitrary>], iteration_bounds = array<i64: 1, 1>, scalar_prefetch = 0 : i64, scratch_operands = 1 : i64, tpu.core_type = #tpu.core_type<tc>, window_params = [{transform_indices = @transform_0, window_bounds = array<i64: 8, 32>}, {transform_indices = @transform_1, window_bounds = array<i64: 8, 1>}, {transform_indices = @transform_2, window_bounds = array<i64: 1, 1, 1>}]} {
    %c0_i32 = arith.constant 0 : i32
    %0 = arith.cmpi eq, %arg1, %c0_i32 : i32
    %1 = arith.extui %0 : i1 to i32
    %c0_i32_0 = arith.constant 0 : i32
    %2 = arith.cmpi ne, %1, %c0_i32_0 : i32
    scf.if %2 {
      %cst_21 = arith.constant 0.000000e+00 : f32
      %56 = vector.broadcast %cst_21 : f32 to vector<1x1xf32>
      %c0_22 = arith.constant 0 : index
      %c0_23 = arith.constant 0 : index
      %57 = vector.load %arg5[%c0_22, %c0_23] : memref<1x1xf32, #tpu.memory_space<vmem>>, vector<1x1xf32>
      tpu.vector_store %arg5[%c0_22, %c0_23], %56 {strides = array<i32>} : memref<1x1xf32, #tpu.memory_space<vmem>>, vector<1x1xf32>,
    } else {
    }
    %c0 = arith.constant 0 : index
    %c0_1 = arith.constant 0 : index
    %3 = vector.load %arg2[%c0, %c0_1] : memref<8x32xf32, #tpu.memory_space<vmem>>, vector<8x32xf32>
    %c0_2 = arith.constant 0 : index
    %c0_3 = arith.constant 0 : index
    %4 = vector.load %arg3[%c0_2, %c0_3] : memref<8x1xi32, #tpu.memory_space<vmem>>, vector<8x1xi32>
    %5 = tpu.iota {dimensions = array<i32: 1>} : vector<8x32xi32>
    %6 = vector.broadcast %4 : vector<8x1xi32> to vector<8x32xi32>
    %7 = arith.cmpi eq, %5, %6 : vector<8x32xi32>
    %cst = arith.constant 0.000000e+00 : f32
    %8 = vector.broadcast %cst : f32 to vector<8x32xf32>
    %9 = arith.select %7, %3, %8 : vector<8x32xi1>, vector<8x32xf32>
    %cst_4 = arith.constant dense<0.000000e+00> : vector<8xf32>
    %10 = vector.multi_reduction <add>, %9, %cst_4 [1] : vector<8x32xf32> to vector<8xf32>
    %11 = vector.shape_cast %10 : vector<8xf32> to vector<8x1xf32>
    %cst_5 = arith.constant dense<0xFF800000> : vector<8xf32>
    %12 = vector.multi_reduction <maximumf>, %3, %cst_5 [1] : vector<8x32xf32> to vector<8xf32>
    %13 = vector.shape_cast %12 : vector<8xf32> to vector<8x1xf32>
    %14 = vector.broadcast %13 : vector<8x1xf32> to vector<8x32xf32>
    %15 = arith.subf %3, %14 : vector<8x32xf32>
    %16 = math.exp %15 : vector<8x32xf32>
    %cst_6 = arith.constant dense<0.000000e+00> : vector<8xf32>
    %17 = vector.multi_reduction <add>, %16, %cst_6 [1] : vector<8x32xf32> to vector<8xf32>
    %18 = vector.shape_cast %17 : vector<8xf32> to vector<8x1xf32>
    %19 = arith.subf %11, %13 : vector<8x1xf32>
    %20 = math.log %18 : vector<8x1xf32>
    %21 = arith.subf %19, %20 : vector<8x1xf32>
    %cst_7 = arith.constant -16.1180954 : f32
    %cst_8 = arith.constant -1.00000008E-7 : f32
    %22 = vector.broadcast %cst_7 : f32 to vector<8x1xf32>
    %23 = arith.maximumf %22, %21 : vector<8x1xf32>
    %24 = vector.broadcast %cst_8 : f32 to vector<8x1xf32>
    %25 = arith.minimumf %24, %23 : vector<8x1xf32>
    %26 = math.exp %25 : vector<8x1xf32>
    %cst_9 = arith.constant 1.000000e+00 : f32
    %27 = vector.broadcast %cst_9 : f32 to vector<8x1xf32>
    %28 = arith.subf %27, %26 : vector<8x1xf32>
    %cst_10 = arith.constant 1.000000e+00 : f32
    %29 = vector.broadcast %cst_10 : f32 to vector<8x1xf32>
    %30 = arith.mulf %29, %28 : vector<8x1xf32>
    %31 = arith.mulf %30, %28 : vector<8x1xf32>
    %c1_i32 = arith.constant 1 : i32
    %32 = arith.muli %arg0, %c1_i32 : i32
    %33 = arith.addi %32, %arg1 : i32
    %c8_i32 = arith.constant 8 : i32
    %34 = arith.muli %33, %c8_i32 : i32
    %35 = tpu.iota {dimensions = array<i32: 0>} : vector<8x1xi32>
    %36 = vector.broadcast %34 : i32 to vector<8x1xi32>
    %37 = arith.addi %35, %36 : vector<8x1xi32>
    %c8_i32_11 = arith.constant 8 : i32
    %38 = vector.broadcast %c8_i32_11 : i32 to vector<8x1xi32>
    %39 = arith.cmpi slt, %37, %38 : vector<8x1xi32>
    %cst_12 = arith.constant 0.000000e+00 : f32
    %40 = vector.broadcast %cst_12 : f32 to vector<8x1xf32>
    %41 = arith.subf %40, %31 : vector<8x1xf32>
    %42 = arith.mulf %41, %25 : vector<8x1xf32>
    %cst_13 = arith.constant 0.000000e+00 : f32
    %43 = vector.broadcast %cst_13 : f32 to vector<8x1xf32>
    %44 = arith.select %39, %42, %43 : vector<8x1xi1>, vector<8x1xf32>
    %c0_14 = arith.constant 0 : index
    %c0_15 = arith.constant 0 : index
    %45 = vector.load %arg5[%c0_14, %c0_15] : memref<1x1xf32, #tpu.memory_space<vmem>>, vector<1x1xf32>
    %46 = vector.shape_cast %44 : vector<8x1xf32> to vector<1x8x1xf32>
    %cst_16 = arith.constant dense<0.000000e+00> : vector<1xf32>
    %47 = vector.multi_reduction <add>, %46, %cst_16 [1, 2] : vector<1x8x1xf32> to vector<1xf32>
    %48 = vector.shape_cast %47 : vector<1xf32> to vector<1x1x1xf32>
    %49 = vector.extract %48[0, 0, 0] : f32 from vector<1x1x1xf32>
    %50 = vector.broadcast %49 : f32 to vector<1x1xf32>
    %51 = arith.addf %45, %50 : vector<1x1xf32>
    %c0_17 = arith.constant 0 : index
    %c0_18 = arith.constant 0 : index
    %52 = vector.load %arg5[%c0_17, %c0_18] : memref<1x1xf32, #tpu.memory_space<vmem>>, vector<1x1xf32>
    tpu.vector_store %arg5[%c0_17, %c0_18], %51 {strides = array<i32>} : memref<1x1xf32, #tpu.memory_space<vmem>>, vector<1x1xf32>,
    %c0_i32_19 = arith.constant 0 : i32
    %53 = arith.cmpi eq, %arg1, %c0_i32_19 : i32
    %54 = arith.extui %53 : i1 to i32
    %c0_i32_20 = arith.constant 0 : i32
    %55 = arith.cmpi ne, %54, %c0_i32_20 : i32
    scf.if %55 {
      %c0_21 = arith.constant 0 : index
      %c0_22 = arith.constant 0 : index
      %56 = vector.load %arg5[%c0_21, %c0_22] : memref<1x1xf32, #tpu.memory_space<vmem>>, vector<1x1xf32>
      %c0_23 = arith.constant 0 : index
      %c0_24 = arith.constant 0 : index
      %c0_25 = arith.constant 0 : index
      %57 = vector.load %arg4[%c0_23, %c0_24, %c0_25] : memref<1x1x1xf32, #tpu.memory_space<vmem>>, vector<1x1x1xf32>
      %58 = vector.shape_cast %57 : vector<1x1x1xf32> to vector<1x1xf32>
      %59 = vector.shape_cast %56 : vector<1x1xf32> to vector<1x1x1xf32>
      tpu.vector_store %arg4[%c0_23, %c0_24, %c0_25], %59 {strides = array<i32>} : memref<1x1x1xf32, #tpu.memory_space<vmem>>, vector<1x1x1xf32>,
    } else {
    }
    return
  }
  func.func @transform_0(%arg0: i32, %arg1: i32) -> (i32, i32) {
    %c1_i32 = arith.constant 1 : i32
    %0 = arith.muli %arg0, %c1_i32 : i32
    %1 = arith.addi %0, %arg1 : i32
    %c0_i32 = arith.constant 0 : i32
    %2 = arith.minsi %1, %c0_i32 : i32
    %c0_i32_0 = arith.constant 0 : i32
    %c0_i32_1 = arith.constant 0 : i32
    return %2, %c0_i32_0 : i32, i32
  }
  func.func @transform_1(%arg0: i32, %arg1: i32) -> (i32, i32) {
    %c1_i32 = arith.constant 1 : i32
    %0 = arith.muli %arg0, %c1_i32 : i32
    %1 = arith.addi %0, %arg1 : i32
    %c0_i32 = arith.constant 0 : i32
    %2 = arith.minsi %1, %c0_i32 : i32
    %c0_i32_0 = arith.constant 0 : i32
    %c0_i32_1 = arith.constant 0 : i32
    return %2, %c0_i32_0 : i32, i32
  }
  func.func @transform_2(%arg0: i32, %arg1: i32) -> (i32, i32, i32) {
    %c0_i32 = arith.constant 0 : i32
    %c0_i32_0 = arith.constant 0 : i32
    %c0_i32_1 = arith.constant 0 : i32
    return %arg0, %c0_i32, %c0_i32_0 : i32, i32, i32
  }
}

</mosaic_0001>

<llo_original>
// kernel: tpu_custom_call.1
$region0: #{tpu_custom_call.1}
  #allocation0 [shape = 'u32[]', space=smem, size = 0x4, offset = 0x4, fixed_abs, tag = 'smem constant byte address 0x4 - core index']
  #allocation1 [shape = 'u32[72,128]{1,0:T(1,128)}', space=vmem, size = 0x9000, scoped, tag = 'internal scratch']
  #allocation2 [shape = 'f32[1,1]{1,0:T(1,128)}', space=vmem, size = 0x200, scoped, tag = 'scratch operand']
  %s0 = inlined_call_operand.vmem [shape: f32[8,32], index: 0, kind: input, shape index: {}]
  %s1 = inlined_call_operand.vmem [shape: s32[8,1], index: 1, kind: input, shape index: {}]
  %s2 = inlined_call_operand.hbm [shape: f32[1,1,1], index: 2, kind: output, shape index: {}]
  %s3 = sld [smem:[#allocation0]]
  $region26: #{tpu_custom_call.1} parent=0
    _
  %s5 = ssub.s32 1, %s3
  %s6 = scalar_select 0, %s5, %s3
  $region1: #{tpu_custom_call.1} parent=0
    #allocation3 [shape = 'u8[512]{0}', space=vmem, size = 0x400, scoped, tag = 'output window, operand 0, single buffered']
    #allocation4 [shape = 's32[1]{0}', space=sflag, size = 0x4, scoped, tag = 'scoped memory for tpu_custom_call.1']
    %7 = vsyncpa [#allocation4], 0
    // Predicated region
    $region2: #{tpu_custom_call.1} parent=1 // pred_check
      _
    $region3: #{tpu_custom_call.1} parent=1 // pred_check_branch
      %9 = sbr.rel (0) target = $region5
    $region4: #{tpu_custom_call.1} parent=1 // pred_region
      %s10 = sadd.s32 0, 0
      %p11 = scmp.lt.s32.totalorder %s10, 0
      %s12 = scalar_select %p11, %s10, 0
      %p13 = scmp.lt.s32.totalorder %s12, 0
      %s14 = scalar_select %p13, %s12, 0
      %s15 = smul.addr %s14, 8
      %s16 = scalar_lea.vmem %s0, %s15
      %s17 = sadd.s32 0, 0
      %p18 = scmp.lt.s32.totalorder %s17, 0
      %s19 = scalar_select %p18, %s17, 0
    $region5: #{tpu_custom_call.1} parent=1 // pred_fallthru
      _
    // Predicated region
    $region6: #{tpu_custom_call.1} parent=1 // pred_check
      _
    $region7: #{tpu_custom_call.1} parent=1 // pred_check_branch
      %21 = sbr.rel (0) target = $region9
    $region8: #{tpu_custom_call.1} parent=1 // pred_region
      %s22 = sadd.s32 0, 0
      %p23 = scmp.lt.s32.totalorder %s22, 0
      %s24 = scalar_select %p23, %s22, 0
      %p25 = scmp.lt.s32.totalorder %s24, 0
      %s26 = scalar_select %p25, %s24, 0
      %s27 = smul.addr %s26, 8
      %s28 = scalar_lea.vmem %s1, %s27
      %s29 = sadd.s32 0, 0
      %p30 = scmp.lt.s32.totalorder %s29, 0
      %s31 = scalar_select %p30, %s29, 0
    $region9: #{tpu_custom_call.1} parent=1 // pred_fallthru
      _
    %s32 = sadd.s32 0, 0
    %p33 = scmp.lt.s32.totalorder %s32, 0
    %s34 = scalar_select %p33, %s32, 0
    %p35 = scmp.lt.s32.totalorder %s34, 0
    %s36 = scalar_select %p35, %s34, 0
    %s37 = smul.addr %s36, 8
    %s38 = scalar_lea.vmem %s0, %s37
    %s39 = sadd.s32 0, 0
    %p40 = scmp.lt.s32.totalorder %s39, 0
    %s41 = scalar_select %p40, %s39, 0
    %p42 = scmp.lt.s32.totalorder %s41, 0
    %s43 = scalar_select %p42, %s41, 0
    %s44 = smul.addr %s43, 8
    %s45 = scalar_lea.vmem %s1, %s44
    %s46 = sadd.s32 0, 0
    %p47 = scmp.lt.s32.totalorder %s46, 0
    %s48 = scalar_select %p47, %s46, 0
    %p49 = scmp.lt.s32.totalorder %s48, 0
    %s50 = scalar_select %p49, %s48, 0
    %s51 = smul.addr %s50, 8
    %s52 = scalar_lea.vmem %s0, %s51
    %s53 = sadd.s32 0, 0
    %p54 = scmp.lt.s32.totalorder %s53, 0
    %s55 = scalar_select %p54, %s53, 0
    %s56 = sadd.s32 0, 0
    %p57 = scmp.lt.s32.totalorder %s56, 0
    %s58 = scalar_select %p57, %s56, 0
    %p59 = scmp.lt.s32.totalorder %s58, 0
    %s60 = scalar_select %p59, %s58, 0
    %s61 = smul.addr %s60, 8
    %s62 = scalar_lea.vmem %s1, %s61
    %s63 = sadd.s32 0, 0
    %p64 = scmp.lt.s32.totalorder %s63, 0
    %s65 = scalar_select %p64, %s63, 0
    %p66 = scmp.eq.s32.totalorder 0, 0
    // Predicated region
    $region10: #{tpu_custom_call.1} parent=1 // pred_check
      %p67 = pneg %p66
    $region11: #{tpu_custom_call.1} parent=1 // pred_check_branch
      %69 = sbr.rel (%p67) target = $region13
    $region12: #{tpu_custom_call.1} parent=1 // pred_region
      %vm70 = vcmask 0
      %71 = vst.msk [vmem:[#allocation2] sm:$0x1] %vm70, 0.0
    $region13: #{tpu_custom_call.1} parent=1 // pred_fallthru
      _
    %v72 = vld [vmem:[%s52] sm:$0xff]
    %v73 = vld [vmem:[%s62] sm:$0xff]
    %v74 = vlaneseq
    %v75 = vand.u32 %v74, 127
    %76 = vset.pattern.permute.xlu0 0
    %77 = vperm.xlu0 %76, %v73
    %v78 = vpop.permute.xlu0 %77
    %vm79 = vcmp.eq.s32.totalorder %v75, %v78
    %v80 = vsel %vm79, %v72, 0.0
    %vm81 = vcmask 261120
    %v82 = vsel %vm81, %v80, 0.0
    %83 = vadd.xlane.f32.xlu0 %v82
    %v84 = vpop.xlane.xlu0 %83
    %v85 = vsel %vm81, %v72, -inf
    %86 = vmax.xlane.f32.xlu0 %v85
    %v87 = vpop.xlane.xlu0 %86
    %v88 = vsub.f32 %v72, %v87
    %v89 = vmul.f32 %v88, 1.442695
    %v90 = vpow.pop %v89
    %v91 = vsel %vm81, %v90, 0.0
    %92 = vadd.xlane.f32.xlu0 %v91
    %v93 = vpop.xlane.xlu0 %92
    %v94 = vsub.f32 %v84, %v87
    %v95 = vlog2.pop %v93
    %v96 = vmul.f32 %v95, 0.6931472
    %v97 = vsub.f32 %v94, %v96
    %v98 = vmax.f32 %v97, -16.118095
    %v99 = vmin.f32 %v98, -1.0000001e-07
    %v100 = vmul.f32 %v99, 1.442695
    %v101 = vpow.pop %v100
    %v102 = vsub.f32 1.0, %v101
    %v103 = vmul.f32 %v102, %v102
    %s104 = sadd.s32 0, 0
    %s105 = smul.u32 %s104, 8
    %v106 = vlaneseq
    %v107 = vshrl.u32 %v106, 7
    %v108 = vstv %s105
    %v109 = vadd.s32 %v107, %v108
    %vm110 = vcmp.lt.s32.totalorder %v109, 8
    %v111 = vsub.f32 0.0, %v103
    %v112 = vmul.f32 %v111, %v99
    %v113 = vsel %vm110, %v112, 0.0
    %v114 = vld [vmem:[#allocation2] sm:$0x1]
    %vm115 = vcmask 7168
    %v116 = vsel %vm115, %v113, 0.0
    %117 = vadd.xlane.f32.xlu0 %v116
    %v118 = vpop.xlane.xlu0 %117
    %v119 = vrot.slane %v118, 4
    %v120 = vadd.f32 %v118, %v119
    %v121 = vrot.slane %v120, 2
    %v122 = vadd.f32 %v120, %v121
    %v123 = vrot.slane %v122, 1
    %v124 = vadd.f32 %v122, %v123
    %s125 = vtos %v124
    %v126 = vstv %s125
    %v127 = vadd.f32 %v114, %v126
    %vm128 = vcmask 0
    %129 = vst.msk [vmem:[#allocation2] sm:$0x1] %vm128, %v127
    // Predicated region
    $region14: #{tpu_custom_call.1} parent=1 // pred_check
      %p130 = pneg %p66
    $region15: #{tpu_custom_call.1} parent=1 // pred_check_branch
      %132 = sbr.rel (%p130) target = $region17
    $region16: #{tpu_custom_call.1} parent=1 // pred_region
      %v133 = vld [vmem:[#allocation2] sm:$0x1]
      %134 = vst.msk [vmem:[#allocation3] sm:$0x1] %vm128, %v133
    $region17: #{tpu_custom_call.1} parent=1 // pred_fallthru
      _
    // Predicated region
    $region18: #{tpu_custom_call.1} parent=1 // pred_check
      _
    $region19: #{tpu_custom_call.1} parent=1 // pred_check_branch
      %136 = sbr.rel (0) target = $region21
    $region20: #{tpu_custom_call.1} parent=1 // pred_region
      %138 = vsyncadd [#allocation4], 0
      %s140 = sshll.u32 [#allocation3], 4
      %s141 = int_to_ptr.vmem [resolvable:$true] %s140
      %s142 = sshll.u32 %s2, 4
      %s143 = int_to_ptr.hbm [resolvable:$true] %s142
      %145 = dma.vmem_to_hbm [thread:$0]  %s141, 16, %s143, [#allocation4]
    $region21: #{tpu_custom_call.1} parent=1 // pred_fallthru
      _
    // Predicated region
    $region22: #{tpu_custom_call.1} parent=1 // pred_check
      _
    $region23: #{tpu_custom_call.1} parent=1 // pred_check_branch
      %147 = sbr.rel (0) target = $region25
    $region24: #{tpu_custom_call.1} parent=1 // pred_region
      %149 = dma.done [#allocation4], 16
    $region25: #{tpu_custom_call.1} parent=1 // pred_fallthru
      _
    %150 = vsyncpa [#allocation4], 1

</llo_original>
